<compile_context>
chip_gen: v7x
topology: tpu7x:2x2x1
jax: 0.10.0
libtpu: 0.0.40
codegen_flags: <defaults>
</compile_context>

<pallas_src>
import jax
import jax.numpy as jnp
from jax.experimental import pallas as pl
from jax.experimental.pallas import tpu as pltpu

_LANE = 128               # vreg lane width
_MAX_BLOCK_ROWS = 4096    # (4096, 128) f32 = 2 MiB per buffer -> ~roofline, few grid steps
_PALLAS_MIN_ELEMS = 65_536  # below this (or lane-ragged B) XLA's fused FMA wins on launch overhead


def _round_up(x: int, m: int) -> int:
    return ((x + m - 1) // m) * m


def _affine_kernel(wb_ref, x_ref, o_ref):
    # wb_ref: (2,) float32 scalars in SMEM -> [weight, bias] (kept f32 for torch parity)
    # x_ref / o_ref: (block_rows, 128) lane-dense tiles in VMEM
    w = wb_ref[0]
    b = wb_ref[1]
    y = x_ref[...].astype(jnp.float32) * w + b   # broadcast FMA on the VPU; no MXU for a 1x1 W
    o_ref[...] = y.astype(o_ref.dtype)


def simple_model_forward(x, w, b):
    """x: (B, 1), w: (1, 1), b: (1,)  ->  (B, 1)  ==  x @ w.T + b."""
    B = x.shape[0]
    w_s = w.reshape(())
    b_s = b.reshape(())

    # Small or lane-ragged batches: XLA's fused multiply-add is already HBM-optimal
    # (2 passes) and avoids kernel launch + any pad/slice copies.
    if B < _PALLAS_MIN_ELEMS or B % _LANE != 0:
        return x * w_s + b_s

    # Lane-aligned large batch: free (metadata-only) reshape to a lane-dense slab.
    n_rows = B // _LANE
    x_slab = x.reshape(n_rows, _LANE)

    # >= 2 blocks so v7x's two TensorCores both stream; rows per block are a multiple of 8
    # sublanes and capped so VMEM stays small on every generation.
    block_rows = min(_MAX_BLOCK_ROWS, _round_up(pl.cdiv(n_rows, 2), 8))
    num_blocks = pl.cdiv(n_rows, block_rows)

    # Weight & bias travel as two float32 scalars in SMEM (no padded VMEM tiles / DMAs).
    wb = jnp.stack([w_s, b_s]).astype(jnp.float32)

    n_elems = n_rows * _LANE
    itemsize = jnp.dtype(x.dtype).itemsize

    y_slab = pl.pallas_call(
        _affine_kernel,
        out_shape=jax.ShapeDtypeStruct((n_rows, _LANE), x.dtype),
        grid=(num_blocks,),
        in_specs=[
            pl.BlockSpec(memory_space=pltpu.MemorySpace.SMEM),        # (2,) f32 scalars
            pl.BlockSpec((block_rows, _LANE), lambda i: (i, 0)),       # x tile
        ],
        out_specs=pl.BlockSpec((block_rows, _LANE), lambda i: (i, 0)),
        compiler_params=pltpu.CompilerParams(
            dimension_semantics=("parallel",),   # lets v7x shard batch tiles over its 2 TCs
        ),
        cost_estimate=pl.CostEstimate(
            flops=2 * n_elems,
            transcendentals=0,
            bytes_accessed=2 * n_elems * itemsize,
        ),
    )(wb, x_slab)

    # Free metadata reshape back — no slice, no extra HBM pass.
    return y_slab.reshape(B, 1)


if __name__ == "__main__":
    key = jax.random.PRNGKey(0)
    kx, kw, kb, k2, k3, k4 = jax.random.split(key, 6)

    # PyTorch Linear(1, 1) default init is U(-1, 1) since fan_in = 1.
    w = jax.random.uniform(kw, (1, 1), jnp.float32, minval=-1.0, maxval=1.0)
    b = jax.random.uniform(kb, (1,), jnp.float32, minval=-1.0, maxval=1.0)

    def ref(xx):
        return xx @ w.T + b

    # (1) Module-native small shape (B=8): fused-XLA fast path.
    x_small = jax.random.normal(kx, (8, 1), jnp.float32)
    y_small = simple_model_forward(x_small, w, b)
    jax.block_until_ready(y_small)
    assert y_small.shape == (8, 1)
    assert jnp.allclose(y_small, ref(x_small), atol=1e-6, rtol=1e-6)

    # (2) Large lane-aligned batch: Pallas path, 2-block parallel grid, zero extra HBM passes.
    x_big = jax.random.normal(k2, (131_072, 1), jnp.float32)
    y_big = simple_model_forward(x_big, w, b)
    jax.block_until_ready(y_big)
    assert y_big.shape == (131_072, 1)
    assert jnp.allclose(y_big, ref(x_big), atol=1e-6, rtol=1e-6)

    # (3) Very large aligned batch: hits the 4096-row block cap, 4-block parallel grid.
    x_huge = jax.random.normal(k3, (2_097_152, 1), jnp.float32)
    y_huge = simple_model_forward(x_huge, w, b)
    jax.block_until_ready(y_huge)
    assert y_huge.shape == (2_097_152, 1)
    assert jnp.allclose(y_huge, ref(x_huge), atol=1e-6, rtol=1e-6)

    # (4) Lane-ragged batch: bandwidth-optimal XLA fallback (no pad / slice copies).
    x_rag = jax.random.normal(k4, (70_003, 1), jnp.float32)
    y_rag = simple_model_forward(x_rag, w, b)
    jax.block_until_ready(y_rag)
    assert y_rag.shape == (70_003, 1)
    assert jnp.allclose(y_rag, ref(x_rag), atol=1e-6, rtol=1e-6)

    print("KERNEL_OK")
</pallas_src>

<mosaic_0001>
module attributes {stable_mosaic.version = 11 : i64} {
  func.func @_affine_kernel(%arg0: i32, %arg1: memref<2xf32, #tpu.memory_space<smem>>, %arg2: memref<512x128xf32, #tpu.memory_space<vmem>>, %arg3: memref<512x128xf32, #tpu.memory_space<vmem>>) attributes {dimension_semantics = [#tpu.dimension_semantics<parallel>], iteration_bounds = array<i64: 2>, scalar_prefetch = 0 : i64, scratch_operands = 0 : i64, tpu.core_type = #tpu.core_type<tc>, window_params = [{transform_indices = @transform_0, window_bounds = array<i64: 2>}, {transform_indices = @transform_1, window_bounds = array<i64: 512, 128>}, {transform_indices = @transform_2, window_bounds = array<i64: 512, 128>}]} {
    %c0 = arith.constant 0 : index
    %0 = memref.load %arg1[%c0] : memref<2xf32, #tpu.memory_space<smem>>
    %c1 = arith.constant 1 : index
    %1 = memref.load %arg1[%c1] : memref<2xf32, #tpu.memory_space<smem>>
    %c0_0 = arith.constant 0 : index
    %c0_1 = arith.constant 0 : index
    %2 = vector.load %arg2[%c0_0, %c0_1] : memref<512x128xf32, #tpu.memory_space<vmem>>, vector<512x128xf32>
    %3 = vector.broadcast %0 : f32 to vector<512x128xf32>
    %4 = arith.mulf %2, %3 : vector<512x128xf32>
    %5 = vector.broadcast %1 : f32 to vector<512x128xf32>
    %6 = arith.addf %4, %5 : vector<512x128xf32>
    %c0_2 = arith.constant 0 : index
    %c0_3 = arith.constant 0 : index
    %7 = vector.load %arg3[%c0_2, %c0_3] : memref<512x128xf32, #tpu.memory_space<vmem>>, vector<512x128xf32>
    tpu.vector_store %arg3[%c0_2, %c0_3], %6 {strides = array<i32>} : memref<512x128xf32, #tpu.memory_space<vmem>>, vector<512x128xf32>,
    return
  }
  func.func @transform_0(%arg0: i32) -> i32 {
    %c0_i32 = arith.constant 0 : i32
    %c0_i32_0 = arith.constant 0 : i32
    return %c0_i32 : i32
  }
  func.func @transform_1(%arg0: i32) -> (i32, i32) {
    %c0_i32 = arith.constant 0 : i32
    %c0_i32_0 = arith.constant 0 : i32
    return %arg0, %c0_i32 : i32, i32
  }
  func.func @transform_2(%arg0: i32) -> (i32, i32) {
    %c0_i32 = arith.constant 0 : i32
    %c0_i32_0 = arith.constant 0 : i32
    return %arg0, %c0_i32 : i32, i32
  }
}

</mosaic_0001>

<llo_original>
// kernel: tpu_custom_call.1
$region0: #{tpu_custom_call.1}
  #allocation0 [shape = 'u32[]', space=smem, size = 0x4, offset = 0x4, fixed_abs, tag = 'smem constant byte address 0x4 - core index']
  #allocation1 [shape = 'u32[144,128]{1,0:T(1,128)}', space=vmem, size = 0x12000, scoped, tag = 'internal scratch']
  %s0 = inlined_call_operand.hbm [shape: f32[2], index: 0, kind: input, shape index: {}]
  %s1 = inlined_call_operand.hbm [shape: f32[1024,128], index: 1, kind: input, shape index: {}]
  %s2 = inlined_call_operand.hbm [shape: f32[1024,128], index: 2, kind: output, shape index: {}]
  %s3 = sld [smem:[#allocation0]]
  $region49: #{tpu_custom_call.1} parent=0
    _
  %s5 = ssub.s32 1, %s3
  %s6 = scalar_select 0, %s5, %s3
  $region1: #{tpu_custom_call.1} parent=0
    #allocation2 [shape = 'u8[512]{0}', space=smem, size = 0x200, scoped, tag = 'input window, operand 0, single buffered']
    #allocation3 [shape = 's32[2]{0}', space=sflag, size = 0x8, scoped, tag = 'scoped memory for tpu_custom_call.1']
    #allocation4 [shape = 's32[2]{0}', space=sflag, size = 0x8, scoped, tag = 'scoped memory for tpu_custom_call.1']
    #allocation5 [shape = 's32[2]{0}', space=sflag, size = 0x8, scoped, tag = 'scoped memory for tpu_custom_call.1']
    #allocation6 [shape = 'u8[524288]{0}', space=vmem, size = 0x80000, scoped, tag = 'input window, operand 1']
    #allocation7 [shape = 'u8[524288]{0}', space=vmem, size = 0x80000, scoped, tag = 'output window, operand 0']
    %7 = vsyncpa [#allocation5], 0
    %8 = vsyncpa [#allocation3], 0
    %s9 = scalar_lea.sflag [#allocation3], 1
    %10 = vsyncpa %s9, 0
    %11 = vsyncpa [#allocation4], 0
    %s12 = scalar_lea.sflag [#allocation4], 1
    %13 = vsyncpa %s12, 0
    loop: start=0, step=1, limit=4
    $region2: #{tpu_custom_call.1} parent=1 // loop_pre_header
      _
    $region3: #{tpu_custom_call.1} parent=1 // loop_header
      %s15 = sphi 0, %s19
      %p16 = scmp.ge.s32.totalorder %s15, 4
      %s23 = sphi 0, %s23
      %s25 = sphi 0, %s23
      %s26 = sphi 0, %s25
      %s40 = sphi 0, %s26
      %s46 = sphi 0, %s48
      %s49 = sphi 0, %s46
      %s50 = sphi 0, %s49
      %s66 = sphi 0, %s50
      %s72 = sphi 0, %s74
      %s75 = sphi 0, %s72
      %s76 = sphi 0, %s75
      %s92 = sphi 0, %s76
    $region4: #{tpu_custom_call.1} parent=1 // loop_header_branch
      %18 = sbr.rel (%p16) target = $region8
    $region5: #{tpu_custom_call.1} parent=1 // loop_body
      %s20 = ssub.s32 %s15, 1
      %s21 = ssub.s32 %s15, 2
      %s22 = sadd.s32 %s15, 1
      %s24 = sadd.s32 %s23, 1
      %p27 = scmp.eq.s32.totalorder %s15, 1
      %p28 = scmp.ne.s32.totalorder %s23, %s25
      %p29 = scmp.eq.s32.totalorder %s15, 0
      %p30 = por %p28, %p29
      %p31 = scmp.ne.s32.totalorder %s23, %s25
      %p32 = scmp.eq.s32.totalorder %s20, 1
      %p33 = por %p31, %p32
      %p34 = scmp.ne.s32.totalorder %s25, %s26
      %p35 = scmp.eq.s32.totalorder %s20, 0
      %p36 = por %p34, %p35
      %p37 = scmp.ne.s32.totalorder %s25, %s26
      %p38 = scmp.eq.s32.totalorder %s21, 1
      %p39 = por %p37, %p38
      %p41 = scmp.ne.s32.totalorder %s26, %s40
      %p42 = scmp.eq.s32.totalorder %s21, 0
      %p43 = por %p41, %p42
      %s44 = ssub.s32 %s15, %s22
      %p45 = scmp.eq.s32.totalorder %s44, 0
      %s47 = sadd.s32 %s46, 1
      %s48 = scalar_select %p45, %s46, %s47
      %p51 = pneg %p45
      %p52 = scmp.eq.s32.totalorder %s15, 1
      %p53 = por %p51, %p52
      %p54 = scmp.ne.s32.totalorder %s46, %s49
      %p55 = scmp.eq.s32.totalorder %s15, 0
      %p56 = por %p54, %p55
      %p57 = scmp.ne.s32.totalorder %s46, %s49
      %p58 = scmp.eq.s32.totalorder %s20, 1
      %p59 = por %p57, %p58
      %p60 = scmp.ne.s32.totalorder %s49, %s50
      %p61 = scmp.eq.s32.totalorder %s20, 0
      %p62 = por %p60, %p61
      %p63 = scmp.ne.s32.totalorder %s49, %s50
      %p64 = scmp.eq.s32.totalorder %s21, 1
      %p65 = por %p63, %p64
      %p67 = scmp.ne.s32.totalorder %s50, %s66
      %p68 = scmp.eq.s32.totalorder %s21, 0
      %p69 = por %p67, %p68
      %s70 = ssub.s32 %s15, %s22
      %p71 = scmp.eq.s32.totalorder %s70, 0
      %s73 = sadd.s32 %s72, 1
      %s74 = scalar_select %p71, %s72, %s73
      %p77 = pneg %p71
      %p78 = scmp.eq.s32.totalorder %s15, 1
      %p79 = por %p77, %p78
      %p80 = scmp.ne.s32.totalorder %s72, %s75
      %p81 = scmp.eq.s32.totalorder %s15, 0
      %p82 = por %p80, %p81
      %p83 = scmp.ne.s32.totalorder %s72, %s75
      %p84 = scmp.eq.s32.totalorder %s20, 1
      %p85 = por %p83, %p84
      %p86 = scmp.ne.s32.totalorder %s75, %s76
      %p87 = scmp.eq.s32.totalorder %s20, 0
      %p88 = por %p86, %p87
      %p89 = scmp.ne.s32.totalorder %s75, %s76
      %p90 = scmp.eq.s32.totalorder %s21, 1
      %p91 = por %p89, %p90
      %p93 = scmp.ne.s32.totalorder %s76, %s92
      %p94 = scmp.eq.s32.totalorder %s21, 0
      %p95 = por %p93, %p94
      %p96 = scmp.le.s32.totalorder 1, %s15
      %p97 = scmp.lt.s32.totalorder %s15, 3
      %p98 = pnand %p96, %p97
      %p99 = pneg %p98
      // Predicated region
      $region9: #{tpu_custom_call.1} parent=5 // pred_check
        _
      $region10: #{tpu_custom_call.1} parent=5 // pred_check_branch
        %101 = sbr.rel (%p98) target = $region12
      $region11: #{tpu_custom_call.1} parent=5 // pred_region
        %s102 = ssub.s32 %s15, 1
        // Predicated region
        $region13: #{tpu_custom_call.1} parent=11 // pred_check
          %p103 = pneg %p36
        $region14: #{tpu_custom_call.1} parent=11 // pred_check_branch
          %105 = sbr.rel (%p103) target = $region16
        $region15: #{tpu_custom_call.1} parent=11 // pred_region
          %s107 = ssub.s32 16, 16
          %108 = vsyncadd [#allocation5], %s107
          %111 = dma.hbm_to_smem %s0, 16, [#allocation2], [#allocation5]
        $region16: #{tpu_custom_call.1} parent=11 // pred_fallthru
          _
      $region12: #{tpu_custom_call.1} parent=5 // pred_fallthru
        _
      %p112 = scmp.lt.s32.totalorder %s15, 2
      // Predicated region
      $region17: #{tpu_custom_call.1} parent=5 // pred_check
        %p113 = pneg %p112
      $region18: #{tpu_custom_call.1} parent=5 // pred_check_branch
        %115 = sbr.rel (%p113) target = $region20
      $region19: #{tpu_custom_call.1} parent=5 // pred_region
        // Predicated region
        $region21: #{tpu_custom_call.1} parent=19 // pred_check
          %p116 = pneg %p56
        $region22: #{tpu_custom_call.1} parent=19 // pred_check_branch
          %118 = sbr.rel (%p116) target = $region24
        $region23: #{tpu_custom_call.1} parent=19 // pred_region
          %s119 = sand.u32 %s46, 1
          %s120 = scalar_lea.sflag [#allocation3], %s119
          %s121 = sand.u32 %s46, 1
          %s122 = smul.addr %s121, 512
          %s123 = scalar_lea.vmem [#allocation6], %s122
          %s124 = smul.u32 64, %s15
          %s126 = ssub.s32 8192, 8192
          %127 = vsyncadd %s120, %s126
          %s128 = smul.addr %s124, 128
          %s129 = scalar_lea.hbm %s1, %s128
          %s130 = sshll.u32 %s123, 4
          %s131 = int_to_ptr.vmem [resolvable:$true] %s130
          %136 = dma.hbm_to_vmem [thread:$0]  %s129, 8192, %s131, %s120, 128, 128, 8
        $region24: #{tpu_custom_call.1} parent=19 // pred_fallthru
          _
      $region20: #{tpu_custom_call.1} parent=5 // pred_fallthru
        _
      %p137 = scmp.le.s32.totalorder 1, %s15
      %p138 = scmp.lt.s32.totalorder %s15, 3
      %p139 = pnand %p137, %p138
      %p140 = pneg %p139
      // Predicated region
      $region25: #{tpu_custom_call.1} parent=5 // pred_check
        _
      $region26: #{tpu_custom_call.1} parent=5 // pred_check_branch
        %142 = sbr.rel (%p139) target = $region28
      $region27: #{tpu_custom_call.1} parent=5 // pred_region
        %s143 = ssub.s32 %s15, 1
        // Predicated region
        $region29: #{tpu_custom_call.1} parent=27 // pred_check
          %p144 = pneg %p36
        $region30: #{tpu_custom_call.1} parent=27 // pred_check_branch
          %146 = sbr.rel (%p144) target = $region32
        $region31: #{tpu_custom_call.1} parent=27 // pred_region
          %147 = dma.done [#allocation5], 16
        $region32: #{tpu_custom_call.1} parent=27 // pred_fallthru
          _
        %s148 = sand.u32 %s49, 1
        %s149 = scalar_lea.sflag [#allocation3], %s148
        %s150 = sand.u32 %s49, 1
        %s151 = smul.addr %s150, 512
        %s152 = scalar_lea.vmem [#allocation6], %s151
        // Predicated region
        $region33: #{tpu_custom_call.1} parent=27 // pred_check
          %p153 = pneg %p62
        $region34: #{tpu_custom_call.1} parent=27 // pred_check_branch
          %155 = sbr.rel (%p153) target = $region36
        $region35: #{tpu_custom_call.1} parent=27 // pred_region
          %156 = dma.done %s149, 8192
        $region36: #{tpu_custom_call.1} parent=27 // pred_fallthru
          _
        %157 = sfence
        %p158 = pneg %p36
        %p159 = pneg %p33
        %s160 = sand.u32 %s49, 1
        %s161 = scalar_lea.sflag [#allocation3], %s160
        %s162 = sand.u32 %s49, 1
        %s163 = smul.addr %s162, 512
        %s164 = scalar_lea.vmem [#allocation6], %s163
        %p165 = pneg %p62
        %p166 = pneg %p59
        %p167 = pneg %p88
        %p168 = pneg %p85
        %s169 = sand.u32 %s75, 1
        %s170 = scalar_lea.sflag [#allocation4], %s169
        %s171 = sand.u32 %s75, 1
        %s172 = smul.addr %s171, 512
        %s173 = scalar_lea.vmem [#allocation7], %s172
        %s174 = smul.u32 64, %s20
        %s175 = smul.u32 64, %s20
        %s176 = sld [smem:[#allocation2]]
        %s177 = sld [smem:[#allocation2 + $0x1]]
        %v178 = vld [vmem:[%s152] sm:$0xff]
        %v179 = vld [vmem:[%s152 + $0x8] sm:$0xff]
        %v180 = vld [vmem:[%s152 + $0x10] sm:$0xff]
        %v181 = vld [vmem:[%s152 + $0x18] sm:$0xff]
        %v182 = vld [vmem:[%s152 + $0x20] sm:$0xff]
        %v183 = vld [vmem:[%s152 + $0x28] sm:$0xff]
        %v184 = vld [vmem:[%s152 + $0x30] sm:$0xff]
        %v185 = vld [vmem:[%s152 + $0x38] sm:$0xff]
        %v186 = vld [vmem:[%s152 + $0x40] sm:$0xff]
        %v187 = vld [vmem:[%s152 + $0x48] sm:$0xff]
        %v188 = vld [vmem:[%s152 + $0x50] sm:$0xff]
        %v189 = vld [vmem:[%s152 + $0x58] sm:$0xff]
        %v190 = vld [vmem:[%s152 + $0x60] sm:$0xff]
        %v191 = vld [vmem:[%s152 + $0x68] sm:$0xff]
        %v192 = vld [vmem:[%s152 + $0x70] sm:$0xff]
        %v193 = vld [vmem:[%s152 + $0x78] sm:$0xff]
        %v194 = vld [vmem:[%s152 + $0x80] sm:$0xff]
        %v195 = vld [vmem:[%s152 + $0x88] sm:$0xff]
        %v196 = vld [vmem:[%s152 + $0x90] sm:$0xff]
        %v197 = vld [vmem:[%s152 + $0x98] sm:$0xff]
        %v198 = vld [vmem:[%s152 + $0xa0] sm:$0xff]
        %v199 = vld [vmem:[%s152 + $0xa8] sm:$0xff]
        %v200 = vld [vmem:[%s152 + $0xb0] sm:$0xff]
        %v201 = vld [vmem:[%s152 + $0xb8] sm:$0xff]
        %v202 = vld [vmem:[%s152 + $0xc0] sm:$0xff]
        %v203 = vld [vmem:[%s152 + $0xc8] sm:$0xff]
        %v204 = vld [vmem:[%s152 + $0xd0] sm:$0xff]
        %v205 = vld [vmem:[%s152 + $0xd8] sm:$0xff]
        %v206 = vld [vmem:[%s152 + $0xe0] sm:$0xff]
        %v207 = vld [vmem:[%s152 + $0xe8] sm:$0xff]
        %v208 = vld [vmem:[%s152 + $0xf0] sm:$0xff]
        %v209 = vld [vmem:[%s152 + $0xf8] sm:$0xff]
        %v210 = vld [vmem:[%s152 + $0x100] sm:$0xff]
        %v211 = vld [vmem:[%s152 + $0x108] sm:$0xff]
        %v212 = vld [vmem:[%s152 + $0x110] sm:$0xff]
        %v213 = vld [vmem:[%s152 + $0x118] sm:$0xff]
        %v214 = vld [vmem:[%s152 + $0x120] sm:$0xff]
        %v215 = vld [vmem:[%s152 + $0x128] sm:$0xff]
        %v216 = vld [vmem:[%s152 + $0x130] sm:$0xff]
        %v217 = vld [vmem:[%s152 + $0x138] sm:$0xff]
        %v218 = vld [vmem:[%s152 + $0x140] sm:$0xff]
        %v219 = vld [vmem:[%s152 + $0x148] sm:$0xff]
        %v220 = vld [vmem:[%s152 + $0x150] sm:$0xff]
        %v221 = vld [vmem:[%s152 + $0x158] sm:$0xff]
        %v222 = vld [vmem:[%s152 + $0x160] sm:$0xff]
        %v223 = vld [vmem:[%s152 + $0x168] sm:$0xff]
        %v224 = vld [vmem:[%s152 + $0x170] sm:$0xff]
        %v225 = vld [vmem:[%s152 + $0x178] sm:$0xff]
        %v226 = vld [vmem:[%s152 + $0x180] sm:$0xff]
        %v227 = vld [vmem:[%s152 + $0x188] sm:$0xff]
        %v228 = vld [vmem:[%s152 + $0x190] sm:$0xff]
        %v229 = vld [vmem:[%s152 + $0x198] sm:$0xff]
        %v230 = vld [vmem:[%s152 + $0x1a0] sm:$0xff]
        %v231 = vld [vmem:[%s152 + $0x1a8] sm:$0xff]
        %v232 = vld [vmem:[%s152 + $0x1b0] sm:$0xff]
        %v233 = vld [vmem:[%s152 + $0x1b8] sm:$0xff]
        %v234 = vld [vmem:[%s152 + $0x1c0] sm:$0xff]
        %v235 = vld [vmem:[%s152 + $0x1c8] sm:$0xff]
        %v236 = vld [vmem:[%s152 + $0x1d0] sm:$0xff]
        %v237 = vld [vmem:[%s152 + $0x1d8] sm:$0xff]
        %v238 = vld [vmem:[%s152 + $0x1e0] sm:$0xff]
        %v239 = vld [vmem:[%s152 + $0x1e8] sm:$0xff]
        %v240 = vld [vmem:[%s152 + $0x1f0] sm:$0xff]
        %v241 = vld [vmem:[%s152 + $0x1f8] sm:$0xff]
        %v242 = vstv %s176
        %v243 = vmul.f32 %v178, %v242
        %v244 = vmul.f32 %v179, %v242
        %v245 = vmul.f32 %v180, %v242
        %v246 = vmul.f32 %v181, %v242
        %v247 = vmul.f32 %v182, %v242
        %v248 = vmul.f32 %v183, %v242
        %v249 = vmul.f32 %v184, %v242
        %v250 = vmul.f32 %v185, %v242
        %v251 = vmul.f32 %v186, %v242
        %v252 = vmul.f32 %v187, %v242
        %v253 = vmul.f32 %v188, %v242
        %v254 = vmul.f32 %v189, %v242
        %v255 = vmul.f32 %v190, %v242
        %v256 = vmul.f32 %v191, %v242
        %v257 = vmul.f32 %v192, %v242
        %v258 = vmul.f32 %v193, %v242
        %v259 = vmul.f32 %v194, %v242
        %v260 = vmul.f32 %v195, %v242
        %v261 = vmul.f32 %v196, %v242
        %v262 = vmul.f32 %v197, %v242
        %v263 = vmul.f32 %v198, %v242
        %v264 = vmul.f32 %v199, %v242
        %v265 = vmul.f32 %v200, %v242
        %v266 = vmul.f32 %v201, %v242
        %v267 = vmul.f32 %v202, %v242
        %v268 = vmul.f32 %v203, %v242
        %v269 = vmul.f32 %v204, %v242
        %v270 = vmul.f32 %v205, %v242
        %v271 = vmul.f32 %v206, %v242
        %v272 = vmul.f32 %v207, %v242
        %v273 = vmul.f32 %v208, %v242
        %v274 = vmul.f32 %v209, %v242
        %v275 = vmul.f32 %v210, %v242
        %v276 = vmul.f32 %v211, %v242
        %v277 = vmul.f32 %v212, %v242
        %v278 = vmul.f32 %v213, %v242
        %v279 = vmul.f32 %v214, %v242
        %v280 = vmul.f32 %v215, %v242
        %v281 = vmul.f32 %v216, %v242
        %v282 = vmul.f32 %v217, %v242
        %v283 = vmul.f32 %v218, %v242
        %v284 = vmul.f32 %v219, %v242
        %v285 = vmul.f32 %v220, %v242
        %v286 = vmul.f32 %v221, %v242
        %v287 = vmul.f32 %v222, %v242
        %v288 = vmul.f32 %v223, %v242
        %v289 = vmul.f32 %v224, %v242
        %v290 = vmul.f32 %v225, %v242
        %v291 = vmul.f32 %v226, %v242
        %v292 = vmul.f32 %v227, %v242
        %v293 = vmul.f32 %v228, %v242
        %v294 = vmul.f32 %v229, %v242
        %v295 = vmul.f32 %v230, %v242
        %v296 = vmul.f32 %v231, %v242
        %v297 = vmul.f32 %v232, %v242
        %v298 = vmul.f32 %v233, %v242
        %v299 = vmul.f32 %v234, %v242
        %v300 = vmul.f32 %v235, %v242
        %v301 = vmul.f32 %v236, %v242
        %v302 = vmul.f32 %v237, %v242
        %v303 = vmul.f32 %v238, %v242
        %v304 = vmul.f32 %v239, %v242
        %v305 = vmul.f32 %v240, %v242
        %v306 = vmul.f32 %v241, %v242
        %v307 = vstv %s177
        %v308 = vadd.f32 %v243, %v307
        %v309 = vadd.f32 %v244, %v307
        %v310 = vadd.f32 %v245, %v307
        %v311 = vadd.f32 %v246, %v307
        %v312 = vadd.f32 %v247, %v307
        %v313 = vadd.f32 %v248, %v307
        %v314 = vadd.f32 %v249, %v307
        %v315 = vadd.f32 %v250, %v307
        %v316 = vadd.f32 %v251, %v307
        %v317 = vadd.f32 %v252, %v307
        %v318 = vadd.f32 %v253, %v307
        %v319 = vadd.f32 %v254, %v307
        %v320 = vadd.f32 %v255, %v307
        %v321 = vadd.f32 %v256, %v307
        %v322 = vadd.f32 %v257, %v307
        %v323 = vadd.f32 %v258, %v307
        %v324 = vadd.f32 %v259, %v307
        %v325 = vadd.f32 %v260, %v307
        %v326 = vadd.f32 %v261, %v307
        %v327 = vadd.f32 %v262, %v307
        %v328 = vadd.f32 %v263, %v307
        %v329 = vadd.f32 %v264, %v307
        %v330 = vadd.f32 %v265, %v307
        %v331 = vadd.f32 %v266, %v307
        %v332 = vadd.f32 %v267, %v307
        %v333 = vadd.f32 %v268, %v307
        %v334 = vadd.f32 %v269, %v307
        %v335 = vadd.f32 %v270, %v307
        %v336 = vadd.f32 %v271, %v307
        %v337 = vadd.f32 %v272, %v307
        %v338 = vadd.f32 %v273, %v307
        %v339 = vadd.f32 %v274, %v307
        %v340 = vadd.f32 %v275, %v307
        %v341 = vadd.f32 %v276, %v307
        %v342 = vadd.f32 %v277, %v307
        %v343 = vadd.f32 %v278, %v307
        %v344 = vadd.f32 %v279, %v307
        %v345 = vadd.f32 %v280, %v307
        %v346 = vadd.f32 %v281, %v307
        %v347 = vadd.f32 %v282, %v307
        %v348 = vadd.f32 %v283, %v307
        %v349 = vadd.f32 %v284, %v307
        %v350 = vadd.f32 %v285, %v307
        %v351 = vadd.f32 %v286, %v307
        %v352 = vadd.f32 %v287, %v307
        %v353 = vadd.f32 %v288, %v307
        %v354 = vadd.f32 %v289, %v307
        %v355 = vadd.f32 %v290, %v307
        %v356 = vadd.f32 %v291, %v307
        %v357 = vadd.f32 %v292, %v307
        %v358 = vadd.f32 %v293, %v307
        %v359 = vadd.f32 %v294, %v307
        %v360 = vadd.f32 %v295, %v307
        %v361 = vadd.f32 %v296, %v307
        %v362 = vadd.f32 %v297, %v307
        %v363 = vadd.f32 %v298, %v307
        %v364 = vadd.f32 %v299, %v307
        %v365 = vadd.f32 %v300, %v307
        %v366 = vadd.f32 %v301, %v307
        %v367 = vadd.f32 %v302, %v307
        %v368 = vadd.f32 %v303, %v307
        %v369 = vadd.f32 %v304, %v307
        %v370 = vadd.f32 %v305, %v307
        %v371 = vadd.f32 %v306, %v307
        %372 = vst [vmem:[%s173] sm:$0xff] %v308
        %373 = vst [vmem:[%s173 + $0x8] sm:$0xff] %v309
        %374 = vst [vmem:[%s173 + $0x10] sm:$0xff] %v310
        %375 = vst [vmem:[%s173 + $0x18] sm:$0xff] %v311
        %376 = vst [vmem:[%s173 + $0x20] sm:$0xff] %v312
        %377 = vst [vmem:[%s173 + $0x28] sm:$0xff] %v313
        %378 = vst [vmem:[%s173 + $0x30] sm:$0xff] %v314
        %379 = vst [vmem:[%s173 + $0x38] sm:$0xff] %v315
        %380 = vst [vmem:[%s173 + $0x40] sm:$0xff] %v316
        %381 = vst [vmem:[%s173 + $0x48] sm:$0xff] %v317
        %382 = vst [vmem:[%s173 + $0x50] sm:$0xff] %v318
        %383 = vst [vmem:[%s173 + $0x58] sm:$0xff] %v319
        %384 = vst [vmem:[%s173 + $0x60] sm:$0xff] %v320
        %385 = vst [vmem:[%s173 + $0x68] sm:$0xff] %v321
        %386 = vst [vmem:[%s173 + $0x70] sm:$0xff] %v322
        %387 = vst [vmem:[%s173 + $0x78] sm:$0xff] %v323
        %388 = vst [vmem:[%s173 + $0x80] sm:$0xff] %v324
        %389 = vst [vmem:[%s173 + $0x88] sm:$0xff] %v325
        %390 = vst [vmem:[%s173 + $0x90] sm:$0xff] %v326
        %391 = vst [vmem:[%s173 + $0x98] sm:$0xff] %v327
        %392 = vst [vmem:[%s173 + $0xa0] sm:$0xff] %v328
        %393 = vst [vmem:[%s173 + $0xa8] sm:$0xff] %v329
        %394 = vst [vmem:[%s173 + $0xb0] sm:$0xff] %v330
        %395 = vst [vmem:[%s173 + $0xb8] sm:$0xff] %v331
        %396 = vst [vmem:[%s173 + $0xc0] sm:$0xff] %v332
        %397 = vst [vmem:[%s173 + $0xc8] sm:$0xff] %v333
        %398 = vst [vmem:[%s173 + $0xd0] sm:$0xff] %v334
        %399 = vst [vmem:[%s173 + $0xd8] sm:$0xff] %v335
        %400 = vst [vmem:[%s173 + $0xe0] sm:$0xff] %v336
        %401 = vst [vmem:[%s173 + $0xe8] sm:$0xff] %v337
        %402 = vst [vmem:[%s173 + $0xf0] sm:$0xff] %v338
        %403 = vst [vmem:[%s173 + $0xf8] sm:$0xff] %v339
        %404 = vst [vmem:[%s173 + $0x100] sm:$0xff] %v340
        %405 = vst [vmem:[%s173 + $0x108] sm:$0xff] %v341
        %406 = vst [vmem:[%s173 + $0x110] sm:$0xff] %v342
        %407 = vst [vmem:[%s173 + $0x118] sm:$0xff] %v343
        %408 = vst [vmem:[%s173 + $0x120] sm:$0xff] %v344
        %409 = vst [vmem:[%s173 + $0x128] sm:$0xff] %v345
        %410 = vst [vmem:[%s173 + $0x130] sm:$0xff] %v346
        %411 = vst [vmem:[%s173 + $0x138] sm:$0xff] %v347
        %412 = vst [vmem:[%s173 + $0x140] sm:$0xff] %v348
        %413 = vst [vmem:[%s173 + $0x148] sm:$0xff] %v349
        %414 = vst [vmem:[%s173 + $0x150] sm:$0xff] %v350
        %415 = vst [vmem:[%s173 + $0x158] sm:$0xff] %v351
        %416 = vst [vmem:[%s173 + $0x160] sm:$0xff] %v352
        %417 = vst [vmem:[%s173 + $0x168] sm:$0xff] %v353
        %418 = vst [vmem:[%s173 + $0x170] sm:$0xff] %v354
        %419 = vst [vmem:[%s173 + $0x178] sm:$0xff] %v355
        %420 = vst [vmem:[%s173 + $0x180] sm:$0xff] %v356
        %421 = vst [vmem:[%s173 + $0x188] sm:$0xff] %v357
        %422 = vst [vmem:[%s173 + $0x190] sm:$0xff] %v358
        %423 = vst [vmem:[%s173 + $0x198] sm:$0xff] %v359
        %424 = vst [vmem:[%s173 + $0x1a0] sm:$0xff] %v360
        %425 = vst [vmem:[%s173 + $0x1a8] sm:$0xff] %v361
        %426 = vst [vmem:[%s173 + $0x1b0] sm:$0xff] %v362
        %427 = vst [vmem:[%s173 + $0x1b8] sm:$0xff] %v363
        %428 = vst [vmem:[%s173 + $0x1c0] sm:$0xff] %v364
        %429 = vst [vmem:[%s173 + $0x1c8] sm:$0xff] %v365
        %430 = vst [vmem:[%s173 + $0x1d0] sm:$0xff] %v366
        %431 = vst [vmem:[%s173 + $0x1d8] sm:$0xff] %v367
        %432 = vst [vmem:[%s173 + $0x1e0] sm:$0xff] %v368
        %433 = vst [vmem:[%s173 + $0x1e8] sm:$0xff] %v369
        %434 = vst [vmem:[%s173 + $0x1f0] sm:$0xff] %v370
        %435 = vst [vmem:[%s173 + $0x1f8] sm:$0xff] %v371
        %s436 = sand.u32 %s75, 1
        %s437 = scalar_lea.sflag [#allocation4], %s436
        %s438 = sand.u32 %s75, 1
        %s439 = smul.addr %s438, 512
        %s440 = scalar_lea.vmem [#allocation7], %s439
        // Predicated region
        $region37: #{tpu_custom_call.1} parent=27 // pred_check
          %p441 = pneg %p85
        $region38: #{tpu_custom_call.1} parent=27 // pred_check_branch
          %443 = sbr.rel (%p441) target = $region40
        $region39: #{tpu_custom_call.1} parent=27 // pred_region
          %s444 = smul.u32 64, %s20
          %s446 = ssub.s32 8192, 8192
          %447 = vsyncadd %s437, %s446
          %s448 = smul.addr %s444, 128
          %s449 = scalar_lea.hbm %s2, %s448
          %s450 = sshll.u32 %s440, 4
          %s451 = int_to_ptr.vmem [resolvable:$true] %s450
          %456 = dma.vmem_to_hbm [thread:$0]  %s451, 8192, %s449, %s437, 128, 128, 8
        $region40: #{tpu_custom_call.1} parent=27 // pred_fallthru
          _
      $region28: #{tpu_custom_call.1} parent=5 // pred_fallthru
        _
      %p457 = scmp.le.s32.totalorder 2, %s15
      // Predicated region
      $region41: #{tpu_custom_call.1} parent=5 // pred_check
        %p458 = pneg %p457
      $region42: #{tpu_custom_call.1} parent=5 // pred_check_branch
        %460 = sbr.rel (%p458) target = $region44
      $region43: #{tpu_custom_call.1} parent=5 // pred_region
        %s461 = ssub.s32 %s15, 2
        // Predicated region
        $region45: #{tpu_custom_call.1} parent=43 // pred_check
          %p462 = pneg %p91
        $region46: #{tpu_custom_call.1} parent=43 // pred_check_branch
          %464 = sbr.rel (%p462) target = $region48
        $region47: #{tpu_custom_call.1} parent=43 // pred_region
          %s465 = sand.u32 %s76, 1
          %s466 = scalar_lea.sflag [#allocation4], %s465
          %s467 = sand.u32 %s76, 1
          %s468 = smul.addr %s467, 512
          %s469 = scalar_lea.vmem [#allocation7], %s468
          %470 = dma.done %s466, 8192
        $region48: #{tpu_custom_call.1} parent=43 // pred_fallthru
          _
      $region44: #{tpu_custom_call.1} parent=5 // pred_fallthru
        _
    $region6: #{tpu_custom_call.1} parent=1 // loop_footer
      %s19 = sadd.s32 1, %s15
    $region7: #{tpu_custom_call.1} parent=1 // loop_footer_branch
      %14 = sbr.rel target = $region3
    $region8: #{tpu_custom_call.1} parent=1 // loop_exit
      _
    %471 = vsyncpa [#allocation3], 1
    %s472 = scalar_lea.sflag [#allocation3], 1
    %473 = vsyncpa %s472, 1
    %474 = vsyncpa [#allocation4], 1
    %s475 = scalar_lea.sflag [#allocation4], 1
    %476 = vsyncpa %s475, 1
    %477 = vsyncpa [#allocation5], 1
    %s478 = scalar_lea.sflag [#allocation5], 1
    %479 = vsyncpa %s478, 1

</llo_original>
